<compile_context>
chip_gen: v7x
topology: tpu7x:2x2x1
jax: 0.10.0
libtpu: 0.0.40
codegen_flags: <defaults>
</compile_context>

<pallas_src>
import functools

import jax
import jax.numpy as jnp
from jax.experimental import pallas as pl
from jax.experimental.pallas import tpu as pltpu


def _round_up(x, m):
    return ((x + m - 1) // m) * m


def _attention_kernel(dec_ref, enc_ref, w1t_ref, w2t_ref, v_ref,
                      ctx_ref, attn_ref, *, seq_len):
    # dec_ref : (BB, Hp)      decoder hidden block (input dtype)
    # enc_ref : (BB, Sp, Hp)  encoder outputs block (input dtype)
    # w1t_ref : (Hp, Hp)      W1.weight.T, bf16 (resident)
    # w2t_ref : (Hp, Hp)      W2.weight.T, bf16 (resident)
    # v_ref   : (1, Hp)       v.weight, f32-capable (resident)
    # ctx_ref : (BB, Hp)      context output (lane-dense)
    # attn_ref: (BB, Sp)      attention weights output
    bb, sp, hp = enc_ref.shape
    dec = dec_ref[...]                                     # (BB, Hp)
    enc = enc_ref[...]                                     # (BB, Sp, Hp)

    # Whole-block projections on the MXU: bf16 operands, f32 accumulation.
    d_proj = jnp.dot(dec.astype(jnp.bfloat16), w1t_ref[...],
                     preferred_element_type=jnp.float32)                     # (BB, Hp)
    e_proj = jnp.dot(enc.reshape(bb * sp, hp).astype(jnp.bfloat16), w2t_ref[...],
                     preferred_element_type=jnp.float32).reshape(bb, sp, hp)  # (BB, Sp, Hp)

    # tanh / energy stay in f32 (v5e has no bf16 VPU/EUP).
    t = jnp.tanh(d_proj[:, None, :] + e_proj)              # (BB, Sp, Hp)
    v_row = v_ref[...].astype(jnp.float32)                 # (1, Hp)
    energy = jnp.sum(t * v_row, axis=-1)                   # (BB, Sp)

    # Mask padded sequence positions (if S was padded up to a multiple of 8).
    if sp != seq_len:
        pos = jax.lax.broadcasted_iota(jnp.int32, (bb, sp), 1)
        energy = jnp.where(pos < seq_len, energy, -1e30)

    # Softmax over the sequence axis; exact normalization.
    m = jnp.max(energy, axis=-1, keepdims=True)
    p = jnp.exp(energy - m)
    attn = p / jnp.sum(p, axis=-1, keepdims=True)          # (BB, Sp) f32

    # context = sum_s attn[b,s] * enc[b,s,:]  (VPU multiply + sublane reduce;
    # enc is promoted to f32 inside the multiply, no separate cast buffer).
    # TODO(synk): when inputs are bf16 on v6e/v7x, keep this multiply in bf16
    # with an f32 reduce to halve VPU traffic.
    ctx = jnp.sum(attn[:, :, None] * enc, axis=1)          # (BB, Hp) f32

    ctx_ref[...] = ctx.astype(ctx_ref.dtype)
    attn_ref[...] = attn.astype(attn_ref.dtype)


def _vmem_capacity_bytes():
    try:
        return int(pltpu.get_tpu_info().vmem_capacity_bytes)
    except Exception:
        return 64 * 1024 * 1024  # conservative fallback (v7x-sized)


def _choose_batch_block(B, Sp, Hp, in_itemsize, out_itemsize, vmem_budget, multi_core):
    """Pick the largest batch block BB that fits the per-generation VMEM budget."""
    # Resident (ideally single-buffered) weights: W1^T/W2^T in bf16 + v in f32.
    weight_bytes = 2 * Hp * Hp * 2 + Hp * 4
    # Per batch row:
    #   - double-buffered input blocks (enc, dec) and output blocks (ctx, attn)
    #   - in-kernel temporaries: bf16 enc copy for the MXU, ~3 f32 (Sp,Hp)
    #     buffers (e_proj, tanh, attn*enc product), small f32 vectors.
    per_row = (2 * (Sp * Hp + Hp) * in_itemsize
               + 2 * (Hp + Sp) * out_itemsize
               + 2 * Sp * Hp
               + 4 * (3 * Sp * Hp + 3 * Hp + 4 * Sp))
    avail = vmem_budget - weight_bytes
    bb = avail // per_row

    if bb >= B:
        if multi_core and B >= 16:
            # 2 TensorCores (v7x): use >=2 grid steps so "parallel" can shard.
            half = max(8, (pl.cdiv(B, 2) // 8) * 8)
            return B if half >= B else half
        return B  # single TC: whole batch in one step, no extra pipeline step

    # Sub-batch block: sublane dim of the 2-D dec/ctx/attn blocks must be a
    # multiple of 8.
    bb = (bb // 8) * 8
    if bb < 8:
        # TODO(synk): fall back to a sequence-tiled (online-softmax) variant
        # instead of erroring for very large S*H.
        raise ValueError(
            "attention_forward: even an 8-row batch block exceeds the VMEM "
            f"budget ({vmem_budget} B); sequence-axis tiling is required for "
            f"S={Sp}, H={Hp}.")
    return bb


def attention_forward(decoder_hidden, encoder_outputs, w1, w2, v, *, batch_block=None):
    """decoder_hidden: (B, H), encoder_outputs: (B, S, H)
       w1, w2: (H, H), v: (1, H)   (torch nn.Linear weight layout)
       returns (context (B, H), attention_weights (B, S))"""
    B, H = decoder_hidden.shape
    _, S, _ = encoder_outputs.shape
    out_dtype = decoder_hidden.dtype
    in_itemsize = jnp.dtype(encoder_outputs.dtype).itemsize
    out_itemsize = jnp.dtype(out_dtype).itemsize

    # Pad H to the lane width (128) and S to the sublane width (8): keeps the
    # in-kernel (BB*S, H) reshape a free view and fills the MXU K/N dims.
    Hp = _round_up(H, 128)
    Sp = _round_up(S, 8)

    # Generation-aware VMEM sizing (v7x has 64 MiB/TC; v5e/v6e have 128 MiB).
    vmem_cap = _vmem_capacity_bytes()
    if vmem_cap <= 64 * 1024 * 1024:
        vmem_budget, vmem_limit, multi_core = 40 << 20, 48 << 20, True
    else:
        vmem_budget, vmem_limit, multi_core = 72 << 20, 96 << 20, False

    if batch_block is not None:
        BB = min(max(1, int(batch_block)), B)
        if BB < B:
            BB = max(8, (BB // 8) * 8)  # enforce sublane-aligned sub-batch blocks
    else:
        BB = _choose_batch_block(B, Sp, Hp, in_itemsize, out_itemsize,
                                 vmem_budget, multi_core)

    Bp = pl.cdiv(B, BB) * BB

    dec = jnp.pad(decoder_hidden, ((0, Bp - B), (0, Hp - H)))
    enc = jnp.pad(encoder_outputs, ((0, Bp - B), (0, Sp - S), (0, Hp - H)))
    # Pre-transpose + pre-cast the MXU weights outside the kernel (no in-kernel
    # relayout, half the resident VMEM footprint).
    w1t = jnp.pad(w1, ((0, Hp - H), (0, Hp - H))).T.astype(jnp.bfloat16)
    w2t = jnp.pad(w2, ((0, Hp - H), (0, Hp - H))).T.astype(jnp.bfloat16)
    vp = jnp.pad(v, ((0, 0), (0, Hp - H)))

    flops = 2 * Bp * Sp * Hp * Hp + 2 * Bp * Hp * Hp + 4 * Bp * Sp * Hp
    transcendentals = Bp * Sp * Hp + Bp * Sp
    bytes_accessed = (in_itemsize * (Bp * Hp + Bp * Sp * Hp)
                      + 2 * (2 * Hp * Hp) + 4 * Hp
                      + out_itemsize * (Bp * Hp + Bp * Sp))

    grid = (Bp // BB,)
    out_shape = (jax.ShapeDtypeStruct((Bp, Hp), out_dtype),
                 jax.ShapeDtypeStruct((Bp, Sp), out_dtype))
    out_specs = (pl.BlockSpec((BB, Hp), lambda b: (b, 0)),   # context, lane-dense
                 pl.BlockSpec((BB, Sp), lambda b: (b, 0)))   # attention weights

    def build(single_buffer_weights):
        wkw = dict(pipeline_mode=pl.Buffered(1)) if single_buffer_weights else {}
        in_specs = [
            pl.BlockSpec((BB, Hp), lambda b: (b, 0)),         # decoder hidden block
            pl.BlockSpec((BB, Sp, Hp), lambda b: (b, 0, 0)),  # encoder outputs block
            pl.BlockSpec((Hp, Hp), lambda b: (0, 0), **wkw),  # W1^T (resident, bf16)
            pl.BlockSpec((Hp, Hp), lambda b: (0, 0), **wkw),  # W2^T (resident, bf16)
            pl.BlockSpec((1, Hp), lambda b: (0, 0), **wkw),   # v (resident)
        ]
        return pl.pallas_call(
            functools.partial(_attention_kernel, seq_len=S),
            out_shape=out_shape,
            grid=grid,
            in_specs=in_specs,
            out_specs=out_specs,
            compiler_params=pltpu.CompilerParams(
                dimension_semantics=("parallel",),
                vmem_limit_bytes=vmem_limit,
            ),
            cost_estimate=pl.CostEstimate(
                flops=flops,
                transcendentals=transcendentals,
                bytes_accessed=bytes_accessed,
            ),
        )

    try:
        ctx, attn = build(True)(dec, enc, w1t, w2t, vp)
        jax.block_until_ready((ctx, attn))
    except Exception:
        # Fallback: this Pallas/Mosaic build rejected single-buffered resident
        # weights (pl.Buffered(1)); use the default double-buffered pipeline.
        ctx, attn = build(False)(dec, enc, w1t, w2t, vp)

    return ctx[:B, :H], attn[:B, :S]


def _reference(decoder_hidden, encoder_outputs, w1, w2, v):
    d = decoder_hidden[:, None, :] @ w1.T            # (B, 1, H)
    e = encoder_outputs @ w2.T                       # (B, S, H)
    energy = jnp.tanh(d + e) @ v.T                   # (B, S, 1)
    attn = jax.nn.softmax(energy[..., 0], axis=1)    # (B, S)
    ctx = jnp.einsum("bs,bsh->bh", attn, encoder_outputs)
    return ctx, attn


if __name__ == "__main__":
    B, S, H = 2, 8, 32
    key = jax.random.PRNGKey(0)
    k_dec, k_enc, k_w1, k_w2, k_v = jax.random.split(key, 5)

    bound = 1.0 / (H ** 0.5)  # mimic torch nn.Linear default uniform init
    decoder_hidden = jax.random.normal(k_dec, (B, H), dtype=jnp.float32)
    encoder_outputs = jax.random.normal(k_enc, (B, S, H), dtype=jnp.float32)
    w1 = jax.random.uniform(k_w1, (H, H), jnp.float32, -bound, bound)
    w2 = jax.random.uniform(k_w2, (H, H), jnp.float32, -bound, bound)
    v = jax.random.uniform(k_v, (1, H), jnp.float32, -bound, bound)

    ctx, attn = attention_forward(decoder_hidden, encoder_outputs, w1, w2, v)
    jax.block_until_ready((ctx, attn))

    ctx_ref, attn_ref = _reference(decoder_hidden, encoder_outputs, w1, w2, v)
    # bf16 MXU operands introduce ~1e-3-level relative error vs. the f32 reference.
    assert jnp.allclose(attn, attn_ref, atol=1e-2, rtol=1e-2)
    assert jnp.allclose(ctx, ctx_ref, atol=1e-2, rtol=1e-2)

    print("KERNEL_OK")
</pallas_src>

<mosaic_0001>
module attributes {stable_mosaic.version = 11 : i64} {
  func.func @_attention_kernel(%arg0: i32, %arg1: memref<2x128xf32, #tpu.memory_space<vmem>>, %arg2: memref<2x8x128xf32, #tpu.memory_space<vmem>>, %arg3: memref<128x128xbf16, #tpu.memory_space<vmem>>, %arg4: memref<128x128xbf16, #tpu.memory_space<vmem>>, %arg5: memref<1x128xf32, #tpu.memory_space<vmem>>, %arg6: memref<2x128xf32, #tpu.memory_space<vmem>>, %arg7: memref<2x8xf32, #tpu.memory_space<vmem>>) attributes {dimension_semantics = [#tpu.dimension_semantics<parallel>], iteration_bounds = array<i64: 1>, scalar_prefetch = 0 : i64, scratch_operands = 0 : i64, tpu.core_type = #tpu.core_type<tc>, window_params = [{transform_indices = @transform_0, window_bounds = array<i64: 2, 128>}, {transform_indices = @transform_1, window_bounds = array<i64: 2, 8, 128>}, {pipeline_mode = #tpu.pipeline_mode<synchronous>, transform_indices = @transform_2, window_bounds = array<i64: 128, 128>}, {pipeline_mode = #tpu.pipeline_mode<synchronous>, transform_indices = @transform_3, window_bounds = array<i64: 128, 128>}, {pipeline_mode = #tpu.pipeline_mode<synchronous>, transform_indices = @transform_4, window_bounds = array<i64: 1, 128>}, {transform_indices = @transform_5, window_bounds = array<i64: 2, 128>}, {transform_indices = @transform_6, window_bounds = array<i64: 2, 8>}]} {
    %c0 = arith.constant 0 : index
    %c0_0 = arith.constant 0 : index
    %0 = vector.load %arg1[%c0, %c0_0] : memref<2x128xf32, #tpu.memory_space<vmem>>, vector<2x128xf32>
    %c0_1 = arith.constant 0 : index
    %c0_2 = arith.constant 0 : index
    %c0_3 = arith.constant 0 : index
    %1 = vector.load %arg2[%c0_1, %c0_2, %c0_3] : memref<2x8x128xf32, #tpu.memory_space<vmem>>, vector<2x8x128xf32>
    %2 = arith.truncf %0 : vector<2x128xf32> to vector<2x128xbf16>
    %c0_4 = arith.constant 0 : index
    %c0_5 = arith.constant 0 : index
    %3 = vector.load %arg3[%c0_4, %c0_5] : memref<128x128xbf16, #tpu.memory_space<vmem>>, vector<128x128xbf16>
    %cst = arith.constant dense<0.000000e+00> : vector<2x128xf32>
    %4 = tpu.matmul %2, %3, %cst {dimension_numbers = #tpu.dot_dimension_numbers<[1], [0], [0], [1], [0, 0, 1, 1], [], []>} : vector<2x128xbf16>, vector<128x128xbf16>, vector<2x128xf32> -> vector<2x128xf32>
    %5 = vector.shape_cast %1 : vector<2x8x128xf32> to vector<16x128xf32>
    %6 = arith.truncf %5 : vector<16x128xf32> to vector<16x128xbf16>
    %c0_6 = arith.constant 0 : index
    %c0_7 = arith.constant 0 : index
    %7 = vector.load %arg4[%c0_6, %c0_7] : memref<128x128xbf16, #tpu.memory_space<vmem>>, vector<128x128xbf16>
    %cst_8 = arith.constant dense<0.000000e+00> : vector<16x128xf32>
    %8 = tpu.matmul %6, %7, %cst_8 {dimension_numbers = #tpu.dot_dimension_numbers<[1], [0], [0], [1], [0, 0, 1, 1], [], []>} : vector<16x128xbf16>, vector<128x128xbf16>, vector<16x128xf32> -> vector<16x128xf32>
    %9 = vector.shape_cast %8 : vector<16x128xf32> to vector<2x8x128xf32>
    %10 = vector.shape_cast %4 : vector<2x128xf32> to vector<2x1x128xf32>
    %11 = vector.broadcast %10 : vector<2x1x128xf32> to vector<2x8x128xf32>
    %12 = arith.addf %11, %9 : vector<2x8x128xf32>
    %13 = math.tanh %12 : vector<2x8x128xf32>
    %c0_9 = arith.constant 0 : index
    %c0_10 = arith.constant 0 : index
    %14 = vector.load %arg5[%c0_9, %c0_10] : memref<1x128xf32, #tpu.memory_space<vmem>>, vector<1x128xf32>
    %15 = vector.shape_cast %14 : vector<1x128xf32> to vector<1x1x128xf32>
    %16 = vector.broadcast %15 : vector<1x1x128xf32> to vector<2x8x128xf32>
    %17 = arith.mulf %13, %16 : vector<2x8x128xf32>
    %cst_11 = arith.constant dense<0.000000e+00> : vector<2x8xf32>
    %18 = vector.multi_reduction <add>, %17, %cst_11 [2] : vector<2x8x128xf32> to vector<2x8xf32>
    %cst_12 = arith.constant dense<0xFF800000> : vector<2xf32>
    %19 = vector.multi_reduction <maximumf>, %18, %cst_12 [1] : vector<2x8xf32> to vector<2xf32>
    %20 = vector.shape_cast %19 : vector<2xf32> to vector<2x1xf32>
    %21 = vector.broadcast %20 : vector<2x1xf32> to vector<2x8xf32>
    %22 = arith.subf %18, %21 : vector<2x8xf32>
    %23 = math.exp %22 : vector<2x8xf32>
    %cst_13 = arith.constant dense<0.000000e+00> : vector<2xf32>
    %24 = vector.multi_reduction <add>, %23, %cst_13 [1] : vector<2x8xf32> to vector<2xf32>
    %25 = vector.shape_cast %24 : vector<2xf32> to vector<2x1xf32>
    %26 = vector.broadcast %25 : vector<2x1xf32> to vector<2x8xf32>
    %27 = arith.divf %23, %26 : vector<2x8xf32>
    %28 = vector.shape_cast %27 : vector<2x8xf32> to vector<2x8x1xf32>
    %29 = vector.broadcast %28 : vector<2x8x1xf32> to vector<2x8x128xf32>
    %30 = arith.mulf %29, %1 : vector<2x8x128xf32>
    %cst_14 = arith.constant dense<0.000000e+00> : vector<2x128xf32>
    %31 = vector.multi_reduction <add>, %30, %cst_14 [1] : vector<2x8x128xf32> to vector<2x128xf32>
    %c0_15 = arith.constant 0 : index
    %c0_16 = arith.constant 0 : index
    %32 = vector.load %arg6[%c0_15, %c0_16] : memref<2x128xf32, #tpu.memory_space<vmem>>, vector<2x128xf32>
    tpu.vector_store %arg6[%c0_15, %c0_16], %31 {strides = array<i32>} : memref<2x128xf32, #tpu.memory_space<vmem>>, vector<2x128xf32>,
    %c0_17 = arith.constant 0 : index
    %c0_18 = arith.constant 0 : index
    %33 = vector.load %arg7[%c0_17, %c0_18] : memref<2x8xf32, #tpu.memory_space<vmem>>, vector<2x8xf32>
    tpu.vector_store %arg7[%c0_17, %c0_18], %27 {strides = array<i32>} : memref<2x8xf32, #tpu.memory_space<vmem>>, vector<2x8xf32>,
    return
  }
  func.func @transform_0(%arg0: i32) -> (i32, i32) {
    %c0_i32 = arith.constant 0 : i32
    %c0_i32_0 = arith.constant 0 : i32
    return %arg0, %c0_i32 : i32, i32
  }
  func.func @transform_1(%arg0: i32) -> (i32, i32, i32) {
    %c0_i32 = arith.constant 0 : i32
    %c0_i32_0 = arith.constant 0 : i32
    %c0_i32_1 = arith.constant 0 : i32
    return %arg0, %c0_i32, %c0_i32_0 : i32, i32, i32
  }
  func.func @transform_2(%arg0: i32) -> (i32, i32) {
    %c0_i32 = arith.constant 0 : i32
    %c0_i32_0 = arith.constant 0 : i32
    %c0_i32_1 = arith.constant 0 : i32
    return %c0_i32, %c0_i32_0 : i32, i32
  }
  func.func @transform_3(%arg0: i32) -> (i32, i32) {
    %c0_i32 = arith.constant 0 : i32
    %c0_i32_0 = arith.constant 0 : i32
    %c0_i32_1 = arith.constant 0 : i32
    return %c0_i32, %c0_i32_0 : i32, i32
  }
  func.func @transform_4(%arg0: i32) -> (i32, i32) {
    %c0_i32 = arith.constant 0 : i32
    %c0_i32_0 = arith.constant 0 : i32
    %c0_i32_1 = arith.constant 0 : i32
    return %c0_i32, %c0_i32_0 : i32, i32
  }
  func.func @transform_5(%arg0: i32) -> (i32, i32) {
    %c0_i32 = arith.constant 0 : i32
    %c0_i32_0 = arith.constant 0 : i32
    return %arg0, %c0_i32 : i32, i32
  }
  func.func @transform_6(%arg0: i32) -> (i32, i32) {
    %c0_i32 = arith.constant 0 : i32
    %c0_i32_0 = arith.constant 0 : i32
    return %arg0, %c0_i32 : i32, i32
  }
}

module attributes {stable_mosaic.version = 11 : i64} {
  func.func @_attention_kernel(%arg0: i32, %arg1: memref<2x128xf32, #tpu.memory_space<vmem>>, %arg2: memref<2x8x128xf32, #tpu.memory_space<vmem>>, %arg3: memref<128x128xbf16, #tpu.memory_space<vmem>>, %arg4: memref<128x128xbf16, #tpu.memory_space<vmem>>, %arg5: memref<1x128xf32, #tpu.memory_space<vmem>>, %arg6: memref<2x128xf32, #tpu.memory_space<vmem>>, %arg7: memref<2x8xf32, #tpu.memory_space<vmem>>) attributes {dimension_semantics = [#tpu.dimension_semantics<parallel>], iteration_bounds = array<i64: 1>, scalar_prefetch = 0 : i64, scratch_operands = 0 : i64, tpu.core_type = #tpu.core_type<tc>, window_params = [{transform_indices = @transform_0, window_bounds = array<i64: 2, 128>}, {transform_indices = @transform_1, window_bounds = array<i64: 2, 8, 128>}, {pipeline_mode = #tpu.pipeline_mode<synchronous>, transform_indices = @transform_2, window_bounds = array<i64: 128, 128>}, {pipeline_mode = #tpu.pipeline_mode<synchronous>, transform_indices = @transform_3, window_bounds = array<i64: 128, 128>}, {pipeline_mode = #tpu.pipeline_mode<synchronous>, transform_indices = @transform_4, window_bounds = array<i64: 1, 128>}, {transform_indices = @transform_5, window_bounds = array<i64: 2, 128>}, {transform_indices = @transform_6, window_bounds = array<i64: 2, 8>}]} {
    %c0 = arith.constant 0 : index
    %c0_0 = arith.constant 0 : index
    %0 = vector.load %arg1[%c0, %c0_0] : memref<2x128xf32, #tpu.memory_space<vmem>>, vector<2x128xf32>
    %c0_1 = arith.constant 0 : index
    %c0_2 = arith.constant 0 : index
    %c0_3 = arith.constant 0 : index
    %1 = vector.load %arg2[%c0_1, %c0_2, %c0_3] : memref<2x8x128xf32, #tpu.memory_space<vmem>>, vector<2x8x128xf32>
    %2 = arith.truncf %0 : vector<2x128xf32> to vector<2x128xbf16>
    %c0_4 = arith.constant 0 : index
    %c0_5 = arith.constant 0 : index
    %3 = vector.load %arg3[%c0_4, %c0_5] : memref<128x128xbf16, #tpu.memory_space<vmem>>, vector<128x128xbf16>
    %cst = arith.constant dense<0.000000e+00> : vector<2x128xf32>
    %4 = tpu.matmul %2, %3, %cst {dimension_numbers = #tpu.dot_dimension_numbers<[1], [0], [0], [1], [0, 0, 1, 1], [], []>} : vector<2x128xbf16>, vector<128x128xbf16>, vector<2x128xf32> -> vector<2x128xf32>
    %5 = vector.shape_cast %1 : vector<2x8x128xf32> to vector<16x128xf32>
    %6 = arith.truncf %5 : vector<16x128xf32> to vector<16x128xbf16>
    %c0_6 = arith.constant 0 : index
    %c0_7 = arith.constant 0 : index
    %7 = vector.load %arg4[%c0_6, %c0_7] : memref<128x128xbf16, #tpu.memory_space<vmem>>, vector<128x128xbf16>
    %cst_8 = arith.constant dense<0.000000e+00> : vector<16x128xf32>
    %8 = tpu.matmul %6, %7, %cst_8 {dimension_numbers = #tpu.dot_dimension_numbers<[1], [0], [0], [1], [0, 0, 1, 1], [], []>} : vector<16x128xbf16>, vector<128x128xbf16>, vector<16x128xf32> -> vector<16x128xf32>
    %9 = vector.shape_cast %8 : vector<16x128xf32> to vector<2x8x128xf32>
    %10 = vector.shape_cast %4 : vector<2x128xf32> to vector<2x1x128xf32>
    %11 = vector.broadcast %10 : vector<2x1x128xf32> to vector<2x8x128xf32>
    %12 = arith.addf %11, %9 : vector<2x8x128xf32>
    %13 = math.tanh %12 : vector<2x8x128xf32>
    %c0_9 = arith.constant 0 : index
    %c0_10 = arith.constant 0 : index
    %14 = vector.load %arg5[%c0_9, %c0_10] : memref<1x128xf32, #tpu.memory_space<vmem>>, vector<1x128xf32>
    %15 = vector.shape_cast %14 : vector<1x128xf32> to vector<1x1x128xf32>
    %16 = vector.broadcast %15 : vector<1x1x128xf32> to vector<2x8x128xf32>
    %17 = arith.mulf %13, %16 : vector<2x8x128xf32>
    %cst_11 = arith.constant dense<0.000000e+00> : vector<2x8xf32>
    %18 = vector.multi_reduction <add>, %17, %cst_11 [2] : vector<2x8x128xf32> to vector<2x8xf32>
    %cst_12 = arith.constant dense<0xFF800000> : vector<2xf32>
    %19 = vector.multi_reduction <maximumf>, %18, %cst_12 [1] : vector<2x8xf32> to vector<2xf32>
    %20 = vector.shape_cast %19 : vector<2xf32> to vector<2x1xf32>
    %21 = vector.broadcast %20 : vector<2x1xf32> to vector<2x8xf32>
    %22 = arith.subf %18, %21 : vector<2x8xf32>
    %23 = math.exp %22 : vector<2x8xf32>
    %cst_13 = arith.constant dense<0.000000e+00> : vector<2xf32>
    %24 = vector.multi_reduction <add>, %23, %cst_13 [1] : vector<2x8xf32> to vector<2xf32>
    %25 = vector.shape_cast %24 : vector<2xf32> to vector<2x1xf32>
    %26 = vector.broadcast %25 : vector<2x1xf32> to vector<2x8xf32>
    %27 = arith.divf %23, %26 : vector<2x8xf32>
    %28 = vector.shape_cast %27 : vector<2x8xf32> to vector<2x8x1xf32>
    %29 = vector.broadcast %28 : vector<2x8x1xf32> to vector<2x8x128xf32>
    %30 = arith.mulf %29, %1 : vector<2x8x128xf32>
    %cst_14 = arith.constant dense<0.000000e+00> : vector<2x128xf32>
    %31 = vector.multi_reduction <add>, %30, %cst_14 [1] : vector<2x8x128xf32> to vector<2x128xf32>
    %c0_15 = arith.constant 0 : index
    %c0_16 = arith.constant 0 : index
    %32 = vector.load %arg6[%c0_15, %c0_16] : memref<2x128xf32, #tpu.memory_space<vmem>>, vector<2x128xf32>
    tpu.vector_store %arg6[%c0_15, %c0_16], %31 {strides = array<i32>} : memref<2x128xf32, #tpu.memory_space<vmem>>, vector<2x128xf32>,
    %c0_17 = arith.constant 0 : index
    %c0_18 = arith.constant 0 : index
    %33 = vector.load %arg7[%c0_17, %c0_18] : memref<2x8xf32, #tpu.memory_space<vmem>>, vector<2x8xf32>
    tpu.vector_store %arg7[%c0_17, %c0_18], %27 {strides = array<i32>} : memref<2x8xf32, #tpu.memory_space<vmem>>, vector<2x8xf32>,
    return
  }
  func.func @transform_0(%arg0: i32) -> (i32, i32) {
    %c0_i32 = arith.constant 0 : i32
    %c0_i32_0 = arith.constant 0 : i32
    return %arg0, %c0_i32 : i32, i32
  }
  func.func @transform_1(%arg0: i32) -> (i32, i32, i32) {
    %c0_i32 = arith.constant 0 : i32
    %c0_i32_0 = arith.constant 0 : i32
    %c0_i32_1 = arith.constant 0 : i32
    return %arg0, %c0_i32, %c0_i32_0 : i32, i32, i32
  }
  func.func @transform_2(%arg0: i32) -> (i32, i32) {
    %c0_i32 = arith.constant 0 : i32
    %c0_i32_0 = arith.constant 0 : i32
    %c0_i32_1 = arith.constant 0 : i32
    return %c0_i32, %c0_i32_0 : i32, i32
  }
  func.func @transform_3(%arg0: i32) -> (i32, i32) {
    %c0_i32 = arith.constant 0 : i32
    %c0_i32_0 = arith.constant 0 : i32
    %c0_i32_1 = arith.constant 0 : i32
    return %c0_i32, %c0_i32_0 : i32, i32
  }
  func.func @transform_4(%arg0: i32) -> (i32, i32) {
    %c0_i32 = arith.constant 0 : i32
    %c0_i32_0 = arith.constant 0 : i32
    %c0_i32_1 = arith.constant 0 : i32
    return %c0_i32, %c0_i32_0 : i32, i32
  }
  func.func @transform_5(%arg0: i32) -> (i32, i32) {
    %c0_i32 = arith.constant 0 : i32
    %c0_i32_0 = arith.constant 0 : i32
    return %arg0, %c0_i32 : i32, i32
  }
  func.func @transform_6(%arg0: i32) -> (i32, i32) {
    %c0_i32 = arith.constant 0 : i32
    %c0_i32_0 = arith.constant 0 : i32
    return %arg0, %c0_i32 : i32, i32
  }
}

</mosaic_0001>

<llo_original>
// kernel: tpu_custom_call.1
$region0: #{tpu_custom_call.1}
  #allocation0 [shape = 'u32[]', space=smem, size = 0x4, offset = 0x4, fixed_abs, tag = 'smem constant byte address 0x4 - core index']
  #allocation1 [shape = 'u32[144,128]{1,0:T(1,128)}', space=vmem, size = 0x12000, scoped, tag = 'internal scratch']
  %s0 = inlined_call_operand.hbm [shape: f32[2,128], index: 0, kind: input, shape index: {}]
  %s1 = inlined_call_operand.hbm [shape: f32[2,8,128], index: 1, kind: input, shape index: {}]
  %s2 = inlined_call_operand.hbm [shape: bf16[128,128], index: 2, kind: input, shape index: {}]
  %s3 = inlined_call_operand.hbm [shape: bf16[128,128], index: 3, kind: input, shape index: {}]
  %s4 = inlined_call_operand.vmem [shape: f32[1,128], index: 4, kind: input, shape index: {}]
  %s5 = inlined_call_operand.hbm [shape: f32[2,128], index: 5, kind: output, shape index: {0}]
  %s6 = inlined_call_operand.hbm [shape: f32[2,8], index: 6, kind: output, shape index: {1}]
  %7 = xla_tuple %s5, %s6
  %s8 = sld [smem:[#allocation0]]
  $region54: #{tpu_custom_call.1} parent=0
    _
  %s10 = ssub.s32 1, %s8
  %s11 = scalar_select 0, %s10, %s8
  $region1: #{tpu_custom_call.1} parent=0
    #allocation2 [shape = 'u8[1024]{0}', space=vmem, size = 0x400, scoped, tag = 'input window, operand 0, single buffered']
    #allocation3 [shape = 's32[1]{0}', space=sflag, size = 0x4, scoped, tag = 'scoped memory for tpu_custom_call.1']
    #allocation4 [shape = 's32[1]{0}', space=sflag, size = 0x4, scoped, tag = 'scoped memory for tpu_custom_call.1']
    #allocation5 [shape = 'u8[8192]{0}', space=vmem, size = 0x2000, scoped, tag = 'input window, operand 1, single buffered']
    #allocation6 [shape = 's32[1]{0}', space=sflag, size = 0x4, scoped, tag = 'scoped memory for tpu_custom_call.1']
    #allocation7 [shape = 'u8[32768]{0}', space=vmem, size = 0x8000, scoped, tag = 'input window, operand 2, single buffered']
    #allocation8 [shape = 'u8[32768]{0}', space=vmem, size = 0x8000, scoped, tag = 'input window, operand 3, single buffered']
    #allocation9 [shape = 's32[1]{0}', space=sflag, size = 0x4, scoped, tag = 'scoped memory for tpu_custom_call.1']
    #allocation10 [shape = 'u8[1024]{0}', space=vmem, size = 0x400, scoped, tag = 'output window, operand 0, single buffered']
    #allocation11 [shape = 'u8[1024]{0}', space=vmem, size = 0x400, scoped, tag = 'output window, operand 1, single buffered']
    #allocation12 [shape = 's32[1]{0}', space=sflag, size = 0x4, scoped, tag = 'scoped memory for tpu_custom_call.1']
    %12 = vsyncpa [#allocation3], 0
    %13 = vsyncpa [#allocation6], 0
    %14 = vsyncpa [#allocation9], 0
    %15 = vsyncpa [#allocation4], 0
    %16 = vsyncpa [#allocation12], 0
    // Predicated region
    $region2: #{tpu_custom_call.1} parent=1 // pred_check
      _
    $region3: #{tpu_custom_call.1} parent=1 // pred_check_branch
      %18 = sbr.rel (0) target = $region5
    $region4: #{tpu_custom_call.1} parent=1 // pred_region
      %s20 = ssub.s32 32, 32
      %21 = vsyncadd [#allocation3], %s20
      %s23 = sshll.u32 [#allocation2], 4
      %s24 = int_to_ptr.vmem [resolvable:$true] %s23
      %26 = dma.hbm_to_vmem [thread:$0]  %s0, 32, %s24, [#allocation3]
    $region5: #{tpu_custom_call.1} parent=1 // pred_fallthru
      _
    // Predicated region
    $region6: #{tpu_custom_call.1} parent=1 // pred_check
      _
    $region7: #{tpu_custom_call.1} parent=1 // pred_check_branch
      %28 = sbr.rel (0) target = $region9
    $region8: #{tpu_custom_call.1} parent=1 // pred_region
      %s30 = ssub.s32 256, 256
      %31 = vsyncadd [#allocation6], %s30
      %s32 = sshll.u32 [#allocation5], 4
      %s33 = int_to_ptr.vmem [resolvable:$true] %s32
      %38 = dma.hbm_to_vmem [thread:$0]  %s1, 256, %s33, [#allocation6], 128, 128, 8
    $region9: #{tpu_custom_call.1} parent=1 // pred_fallthru
      _
    // Predicated region
    $region10: #{tpu_custom_call.1} parent=1 // pred_check
      _
    $region11: #{tpu_custom_call.1} parent=1 // pred_check_branch
      %40 = sbr.rel (0) target = $region13
    $region12: #{tpu_custom_call.1} parent=1 // pred_region
      %s42 = ssub.s32 1024, 1024
      %43 = vsyncadd [#allocation6], %s42
      %s44 = sshll.u32 [#allocation7], 4
      %s45 = int_to_ptr.vmem [resolvable:$true] %s44
      %50 = dma.hbm_to_vmem [thread:$0]  %s2, 1024, %s45, [#allocation6], 64, 64, 4
    $region13: #{tpu_custom_call.1} parent=1 // pred_fallthru
      _
    // Predicated region
    $region14: #{tpu_custom_call.1} parent=1 // pred_check
      _
    $region15: #{tpu_custom_call.1} parent=1 // pred_check_branch
      %52 = sbr.rel (0) target = $region17
    $region16: #{tpu_custom_call.1} parent=1 // pred_region
      %s54 = ssub.s32 1024, 1024
      %55 = vsyncadd [#allocation9], %s54
      %s56 = sshll.u32 [#allocation8], 4
      %s57 = int_to_ptr.vmem [resolvable:$true] %s56
      %62 = dma.hbm_to_vmem [thread:$0]  %s3, 1024, %s57, [#allocation9], 64, 64, 4
    $region17: #{tpu_custom_call.1} parent=1 // pred_fallthru
      _
    // Predicated region
    $region18: #{tpu_custom_call.1} parent=1 // pred_check
      _
    $region19: #{tpu_custom_call.1} parent=1 // pred_check_branch
      %64 = sbr.rel (0) target = $region21
    $region20: #{tpu_custom_call.1} parent=1 // pred_region
      _
    $region21: #{tpu_custom_call.1} parent=1 // pred_fallthru
      _
    // Predicated region
    $region22: #{tpu_custom_call.1} parent=1 // pred_check
      _
    $region23: #{tpu_custom_call.1} parent=1 // pred_check_branch
      %66 = sbr.rel (0) target = $region25
    $region24: #{tpu_custom_call.1} parent=1 // pred_region
      %67 = dma.done [#allocation3], 32
    $region25: #{tpu_custom_call.1} parent=1 // pred_fallthru
      _
    // Predicated region
    $region26: #{tpu_custom_call.1} parent=1 // pred_check
      _
    $region27: #{tpu_custom_call.1} parent=1 // pred_check_branch
      %69 = sbr.rel (0) target = $region29
    $region28: #{tpu_custom_call.1} parent=1 // pred_region
      %70 = dma.done [#allocation6], 256
    $region29: #{tpu_custom_call.1} parent=1 // pred_fallthru
      _
    // Predicated region
    $region30: #{tpu_custom_call.1} parent=1 // pred_check
      _
    $region31: #{tpu_custom_call.1} parent=1 // pred_check_branch
      %72 = sbr.rel (0) target = $region33
    $region32: #{tpu_custom_call.1} parent=1 // pred_region
      %73 = dma.done [#allocation6], 1024
    $region33: #{tpu_custom_call.1} parent=1 // pred_fallthru
      _
    // Predicated region
    $region34: #{tpu_custom_call.1} parent=1 // pred_check
      _
    $region35: #{tpu_custom_call.1} parent=1 // pred_check_branch
      %75 = sbr.rel (0) target = $region37
    $region36: #{tpu_custom_call.1} parent=1 // pred_region
      %76 = dma.done [#allocation9], 1024
    $region37: #{tpu_custom_call.1} parent=1 // pred_fallthru
      _
    %v78 = vld [vmem:[#allocation2] sm:$0x3]
    %v79 = vld [vmem:[#allocation5] sm:$0xff]
    %v80 = vld [vmem:[#allocation5 + $0x8] sm:$0xff]
    %v81 = vpack.c.bf16 %v78, %v78
    %v82 = vld [vmem:[#allocation7] sm:$0xf]
    %v83 = vld [vmem:[#allocation7 + $0x4] sm:$0xf]
    %v84 = vld [vmem:[#allocation7 + $0x8] sm:$0xf]
    %v85 = vld [vmem:[#allocation7 + $0xc] sm:$0xf]
    %v86 = vld [vmem:[#allocation7 + $0x10] sm:$0xf]
    %v87 = vld [vmem:[#allocation7 + $0x14] sm:$0xf]
    %v88 = vld [vmem:[#allocation7 + $0x18] sm:$0xf]
    %v89 = vld [vmem:[#allocation7 + $0x1c] sm:$0xf]
    %v90 = vld [vmem:[#allocation7 + $0x20] sm:$0xf]
    %v91 = vld [vmem:[#allocation7 + $0x24] sm:$0xf]
    %v92 = vld [vmem:[#allocation7 + $0x28] sm:$0xf]
    %v93 = vld [vmem:[#allocation7 + $0x2c] sm:$0xf]
    %v94 = vld [vmem:[#allocation7 + $0x30] sm:$0xf]
    %v95 = vld [vmem:[#allocation7 + $0x34] sm:$0xf]
    %v96 = vld [vmem:[#allocation7 + $0x38] sm:$0xf]
    %v97 = vld [vmem:[#allocation7 + $0x3c] sm:$0xf]
    %v114 = vunpack.c.l.b16 %v82
    %v115 = vunpack.c.l.b16 %v83
    %v116 = vunpack.c.l.b16 %v84
    %v117 = vunpack.c.l.b16 %v85
    %v118 = vunpack.c.l.b16 %v86
    %v119 = vunpack.c.l.b16 %v87
    %v120 = vunpack.c.l.b16 %v88
    %v121 = vunpack.c.l.b16 %v89
    %v122 = vunpack.c.l.b16 %v90
    %v123 = vunpack.c.l.b16 %v91
    %v124 = vunpack.c.l.b16 %v92
    %v125 = vunpack.c.l.b16 %v93
    %v126 = vunpack.c.l.b16 %v94
    %v127 = vunpack.c.l.b16 %v95
    %v128 = vunpack.c.l.b16 %v96
    %v129 = vunpack.c.l.b16 %v97
    %v130 = vpack.c.b16 %v115, %v114
    %v131 = vpack.c.b16 %v117, %v116
    %v132 = vpack.c.b16 %v119, %v118
    %v133 = vpack.c.b16 %v121, %v120
    %v134 = vpack.c.b16 %v123, %v122
    %v135 = vpack.c.b16 %v125, %v124
    %v136 = vpack.c.b16 %v127, %v126
    %v137 = vpack.c.b16 %v129, %v128
    %146 = vmatprep.subr.bf16.mxu0 0
    %147 = vmatpush1.bf16.msra.mxu0 %v130
    %148 = vmatprep.subr.bf16.mxu0 0
    %149 = vmatpush1.bf16.msra.mxu0 %v131
    %150 = vmatprep.subr.bf16.mxu0 0
    %151 = vmatpush1.bf16.msra.mxu0 %v132
    %152 = vmatprep.subr.bf16.mxu0 0
    %153 = vmatpush1.bf16.msra.mxu0 %v133
    %154 = vmatprep.subr.bf16.mxu0 0
    %155 = vmatpush1.bf16.msra.mxu0 %v134
    %156 = vmatprep.subr.bf16.mxu0 0
    %157 = vmatpush1.bf16.msra.mxu0 %v135
    %158 = vmatprep.subr.bf16.mxu0 0
    %159 = vmatpush1.bf16.msra.mxu0 %v136
    %160 = vmatprep.subr.bf16.mxu0 0
    %161 = vmatpush1.bf16.msra.mxu0 %v137
    %162 = vmatprep.subr.bf16.mxu0 0
    %163 = vmatpush1.bf16.msra.mxu0 0
    %164 = vmatprep.subr.bf16.mxu0 0
    %165 = vmatpush1.bf16.msra.mxu0 0
    %166 = vmatprep.subr.bf16.mxu0 0
    %167 = vmatpush1.bf16.msra.mxu0 0
    %168 = vmatprep.subr.bf16.mxu0 0
    %169 = vmatpush1.bf16.msra.mxu0 0
    %170 = vmatprep.subr.bf16.mxu0 0
    %171 = vmatpush1.bf16.msra.mxu0 0
    %172 = vmatprep.subr.bf16.mxu0 0
    %173 = vmatpush1.bf16.msra.mxu0 0
    %174 = vmatprep.subr.bf16.mxu0 0
    %175 = vmatpush1.bf16.msra.mxu0 0
    %176 = vmatprep.subr.bf16.mxu0 0
    %177 = vmatpush1.bf16.msra.mxu0 0
    %178 = vmatprep.mubr.bf16.mxu0 0
    %179 = vmatmul.mubr.bf16.gmra.mrb[0].mxu0 %v81
    %v180 = vpop.f32.mrb[0].mxu0
    %v181 = vadd.f32 0.0, %v180
    %v182 = vpop.f32.mrb[0].mxu0
    %v183 = vpop.f32.mrb[0].mxu0
    %v184 = vpop.f32.mrb[0].mxu0
    %185 = vdwg.mxu0
    %v186 = vpack.c.bf16 %v80, %v79
    %v187 = vld [vmem:[#allocation8] sm:$0xf]
    %v188 = vld [vmem:[#allocation8 + $0x4] sm:$0xf]
    %v189 = vld [vmem:[#allocation8 + $0x8] sm:$0xf]
    %v190 = vld [vmem:[#allocation8 + $0xc] sm:$0xf]
    %v191 = vld [vmem:[#allocation8 + $0x10] sm:$0xf]
    %v192 = vld [vmem:[#allocation8 + $0x14] sm:$0xf]
    %v193 = vld [vmem:[#allocation8 + $0x18] sm:$0xf]
    %v194 = vld [vmem:[#allocation8 + $0x1c] sm:$0xf]
    %v195 = vld [vmem:[#allocation8 + $0x20] sm:$0xf]
    %v196 = vld [vmem:[#allocation8 + $0x24] sm:$0xf]
    %v197 = vld [vmem:[#allocation8 + $0x28] sm:$0xf]
    %v198 = vld [vmem:[#allocation8 + $0x2c] sm:$0xf]
    %v199 = vld [vmem:[#allocation8 + $0x30] sm:$0xf]
    %v200 = vld [vmem:[#allocation8 + $0x34] sm:$0xf]
    %v201 = vld [vmem:[#allocation8 + $0x38] sm:$0xf]
    %v202 = vld [vmem:[#allocation8 + $0x3c] sm:$0xf]
    %v219 = vunpack.c.l.b16 %v187
    %v220 = vunpack.c.l.b16 %v188
    %v221 = vunpack.c.l.b16 %v189
    %v222 = vunpack.c.l.b16 %v190
    %v223 = vunpack.c.l.b16 %v191
    %v224 = vunpack.c.l.b16 %v192
    %v225 = vunpack.c.l.b16 %v193
    %v226 = vunpack.c.l.b16 %v194
    %v227 = vunpack.c.l.b16 %v195
    %v228 = vunpack.c.l.b16 %v196
    %v229 = vunpack.c.l.b16 %v197
    %v230 = vunpack.c.l.b16 %v198
    %v231 = vunpack.c.l.b16 %v199
    %v232 = vunpack.c.l.b16 %v200
    %v233 = vunpack.c.l.b16 %v201
    %v234 = vunpack.c.l.b16 %v202
    %v235 = vpack.c.b16 %v220, %v219
    %v236 = vpack.c.b16 %v222, %v221
    %v237 = vpack.c.b16 %v224, %v223
    %v238 = vpack.c.b16 %v226, %v225
    %v239 = vpack.c.b16 %v228, %v227
    %v240 = vpack.c.b16 %v230, %v229
    %v241 = vpack.c.b16 %v232, %v231
    %v242 = vpack.c.b16 %v234, %v233
    %251 = vmatprep.subr.bf16.mxu0 0
    %252 = vmatpush1.bf16.msra.mxu0 %v235
    %253 = vmatprep.subr.bf16.mxu0 0
    %254 = vmatpush1.bf16.msra.mxu0 %v236
    %255 = vmatprep.subr.bf16.mxu0 0
    %256 = vmatpush1.bf16.msra.mxu0 %v237
    %257 = vmatprep.subr.bf16.mxu0 0
    %258 = vmatpush1.bf16.msra.mxu0 %v238
    %259 = vmatprep.subr.bf16.mxu0 0
    %260 = vmatpush1.bf16.msra.mxu0 %v239
    %261 = vmatprep.subr.bf16.mxu0 0
    %262 = vmatpush1.bf16.msra.mxu0 %v240
    %263 = vmatprep.subr.bf16.mxu0 0
    %264 = vmatpush1.bf16.msra.mxu0 %v241
    %265 = vmatprep.subr.bf16.mxu0 0
    %266 = vmatpush1.bf16.msra.mxu0 %v242
    %267 = vmatprep.subr.bf16.mxu0 0
    %268 = vmatpush1.bf16.msra.mxu0 0
    %269 = vmatprep.subr.bf16.mxu0 0
    %270 = vmatpush1.bf16.msra.mxu0 0
    %271 = vmatprep.subr.bf16.mxu0 0
    %272 = vmatpush1.bf16.msra.mxu0 0
    %273 = vmatprep.subr.bf16.mxu0 0
    %274 = vmatpush1.bf16.msra.mxu0 0
    %275 = vmatprep.subr.bf16.mxu0 0
    %276 = vmatpush1.bf16.msra.mxu0 0
    %277 = vmatprep.subr.bf16.mxu0 0
    %278 = vmatpush1.bf16.msra.mxu0 0
    %279 = vmatprep.subr.bf16.mxu0 0
    %280 = vmatpush1.bf16.msra.mxu0 0
    %281 = vmatprep.subr.bf16.mxu0 0
    %282 = vmatpush1.bf16.msra.mxu0 0
    %283 = vmatprep.mubr.bf16.mxu0 0
    %284 = vmatmul.mubr.bf16.gmra.mrb[0].mxu0 %v186
    %v285 = vpop.f32.mrb[0].mxu0
    %v286 = vadd.f32 0.0, %v285
    %v287 = vpop.f32.mrb[0].mxu0
    %v288 = vpop.f32.mrb[0].mxu0
    %v289 = vadd.f32 0.0, %v288
    %v290 = vpop.f32.mrb[0].mxu0
    %291 = vdwg.mxu0
    %v294 = vunpack.c.l.s4 1966171168
    %v295 = vunpack.c.0.s8 %v294
    %v296 = vlaneseq
    %v297 = vshrl.u32 %v296, 7
    %v298 = vsub.s32 %v295, %v297
    %v299 = vrot.slane %v181, %v298
    %v300 = vcombine.high %v299, %v299
    %v302 = vunpack.c.l.s4 1966171168
    %v303 = vunpack.c.0.s8 %v302
    %v304 = vlaneseq
    %v305 = vshrl.u32 %v304, 7
    %v306 = vsub.s32 %v303, %v305
    %v307 = vrot.slane %v299, %v306
    %v309 = vunpack.c.l.s4 1966171168
    %v310 = vunpack.c.0.s8 %v309
    %v311 = vlaneseq
    %v312 = vshrl.u32 %v311, 7
    %v313 = vsub.s32 %v310, %v312
    %v314 = vrot.slane %v300, %v313
    %v315 = vlaneseq
    %v316 = vshrl.u32 %v315, 7
    %v317 = vsub.s32 0, %v316
    %v318 = vrot.slane %v307, %v317
    %v319 = vlaneseq
    %v320 = vshrl.u32 %v319, 7
    %v321 = vsub.s32 0, %v320
    %v322 = vrot.slane %v314, %v321
    %v325 = vadd.f32 %v318, %v286
    %v326 = vadd.f32 %v322, %v289
    %v327 = vtanh.pop %v325
    %v328 = vtanh.pop %v326
    %v329 = vld [vmem:[%s4] sm:$0x1]
    %v331 = vlaneseq
    %v332 = vshrl.u32 %v331, 7
    %v333 = vsub.s32 0, %v332
    %v334 = vrot.slane %v329, %v333
    %v336 = vmul.f32 %v327, %v334
    %v337 = vmul.f32 %v328, %v334
    %338 = vadd.xlane.f32.xlu0 %v336
    %v339 = vpop.xlane.xlu0 %338
    %340 = vadd.xlane.f32.xlu0 %v337
    %v341 = vpop.xlane.xlu0 %340
    %v344 = vlaneseq
    %v345 = vand.u32 %v344, 127
    %v346 = vlaneseq
    %v347 = vshrl.u32 %v346, 7
    %v348 = vsub.s32 %v345, %v347
    %v349 = vrot.slane %v339, %v348
    %v350 = vlaneseq
    %v351 = vshrl.u32 %v350, 7
    %v352 = vsub.s32 %v345, %v351
    %v353 = vrot.slane %v341, %v352
    %vm354 = vcmask 1041409
    %v355 = vsel %vm354, %v353, %v349
    %vm357 = vcmask 58368
    %v358 = vsel %vm357, %v355, -inf
    %359 = vmax.xlane.f32.xlu0 %v358
    %v360 = vpop.xlane.xlu0 %359
    %v362 = vlaneseq
    %v363 = vshrl.u32 %v362, 7
    %v364 = vsub.s32 0, %v363
    %v365 = vrot.slane %v360, %v364
    %v366 = vlaneseq
    %v367 = vshrl.u32 %v366, 7
    %v368 = vsub.s32 1, %v367
    %v369 = vrot.slane %v360, %v368
    %v372 = vsub.f32 %v339, %v365
    %v373 = vsub.f32 %v341, %v369
    %v374 = vmul.f32 %v372, 1.442695
    %v375 = vpow.pop %v374
    %v376 = vmul.f32 %v373, 1.442695
    %v377 = vpow.pop %v376
    %380 = vset.pattern.permute.xlu0 0
    %381 = vperm.xlu0 %380, %v375
    %v382 = vpop.permute.xlu0 %381
    %383 = vset.pattern.permute.xlu0 0
    %384 = vperm.xlu0 %383, %v377
    %v385 = vpop.permute.xlu0 %384
    %v386 = vlaneseq
    %v387 = vshrl.u32 %v386, 7
    %v388 = vsub.s32 %v345, %v387
    %v389 = vrot.slane %v382, %v388
    %v390 = vlaneseq
    %v391 = vshrl.u32 %v390, 7
    %v392 = vsub.s32 %v345, %v391
    %v393 = vrot.slane %v385, %v392
    %v394 = vsel %vm354, %v393, %v389
    %v396 = vsel %vm357, %v394, 0.0
    %397 = vadd.xlane.f32.xlu0 %v396
    %v398 = vpop.xlane.xlu0 %397
    %v400 = vlaneseq
    %v401 = vshrl.u32 %v400, 7
    %v402 = vsub.s32 0, %v401
    %v403 = vrot.slane %v398, %v402
    %v404 = vlaneseq
    %v405 = vshrl.u32 %v404, 7
    %v406 = vsub.s32 1, %v405
    %v407 = vrot.slane %v398, %v406
    %v410 = vrcp.pop %v403
    %v411 = vmul.f32 %v375, %v410
    %v412 = vrcp.pop %v407
    %v413 = vmul.f32 %v377, %v412
    %415 = vset.pattern.permute.xlu0 0
    %416 = vperm.xlu0 %415, %v411
    %v417 = vpop.permute.xlu0 %416
    %420 = vset.pattern.permute.xlu0 0
    %421 = vperm.xlu0 %420, %v413
    %v422 = vpop.permute.xlu0 %421
    %v424 = vmul.f32 %v417, %v79
    %v425 = vmul.f32 %v422, %v80
    %v426 = vrot.slane %v424, 4
    %v427 = vadd.f32 %v424, %v426
    %v428 = vrot.slane %v427, 2
    %v429 = vadd.f32 %v427, %v428
    %v430 = vrot.slane %v429, 1
    %v431 = vadd.f32 %v429, %v430
    %v432 = vrot.slane %v425, 4
    %v433 = vadd.f32 %v425, %v432
    %v434 = vrot.slane %v433, 2
    %v435 = vadd.f32 %v433, %v434
    %v436 = vrot.slane %v435, 1
    %v437 = vadd.f32 %v435, %v436
    %v440 = vsel %vm354, %v437, %v431
    %442 = vst [vmem:[#allocation10] sm:$0x3] %v440
    %v443 = vlaneseq
    %v444 = vshrl.u32 %v443, 7
    %v445 = vsub.s32 %v345, %v444
    %v446 = vrot.slane %v417, %v445
    %v447 = vlaneseq
    %v448 = vshrl.u32 %v447, 7
    %v449 = vsub.s32 %v345, %v448
    %v450 = vrot.slane %v422, %v449
    %v451 = vsel %vm354, %v450, %v446
    %453 = vst.msk [vmem:[#allocation11] sm:$0x3] %vm357, %v451
    // Predicated region
    $region38: #{tpu_custom_call.1} parent=1 // pred_check
      _
    $region39: #{tpu_custom_call.1} parent=1 // pred_check_branch
      %455 = sbr.rel (0) target = $region41
    $region40: #{tpu_custom_call.1} parent=1 // pred_region
      %s457 = ssub.s32 32, 32
      %458 = vsyncadd [#allocation4], %s457
      %s460 = sshll.u32 [#allocation10], 4
      %s461 = int_to_ptr.vmem [resolvable:$true] %s460
      %463 = dma.vmem_to_hbm [thread:$0]  %s461, 32, %s5, [#allocation4]
    $region41: #{tpu_custom_call.1} parent=1 // pred_fallthru
      _
    // Predicated region
    $region42: #{tpu_custom_call.1} parent=1 // pred_check
      _
    $region43: #{tpu_custom_call.1} parent=1 // pred_check_branch
      %465 = sbr.rel (0) target = $region45
    $region44: #{tpu_custom_call.1} parent=1 // pred_region
      %s467 = ssub.s32 32, 32
      %468 = vsyncadd [#allocation12], %s467
      %s470 = sshll.u32 [#allocation11], 4
      %s471 = int_to_ptr.vmem [resolvable:$true] %s470
      %473 = dma.vmem_to_hbm [thread:$0]  %s471, 32, %s6, [#allocation12]
    $region45: #{tpu_custom_call.1} parent=1 // pred_fallthru
      _
    // Predicated region
    $region46: #{tpu_custom_call.1} parent=1 // pred_check
      _
    $region47: #{tpu_custom_call.1} parent=1 // pred_check_branch
      %475 = sbr.rel (0) target = $region49
    $region48: #{tpu_custom_call.1} parent=1 // pred_region
      %476 = dma.done [#allocation4], 32
    $region49: #{tpu_custom_call.1} parent=1 // pred_fallthru
      _
    // Predicated region
    $region50: #{tpu_custom_call.1} parent=1 // pred_check
      _
    $region51: #{tpu_custom_call.1} parent=1 // pred_check_branch
      %478 = sbr.rel (0) target = $region53
    $region52: #{tpu_custom_call.1} parent=1 // pred_region
      %479 = dma.done [#allocation12], 32
    $region53: #{tpu_custom_call.1} parent=1 // pred_fallthru
      _
    %480 = vsyncpa [#allocation3], 1
    %481 = vsyncpa [#allocation6], 1
    %482 = vsyncpa [#allocation9], 1
    %483 = vsyncpa [#allocation4], 1
    %484 = vsyncpa [#allocation12], 1

// kernel: tpu_custom_call.1
$region0: #{tpu_custom_call.1}
  #allocation0 [shape = 'u32[]', space=smem, size = 0x4, offset = 0x4, fixed_abs, tag = 'smem constant byte address 0x4 - core index']
  #allocation1 [shape = 'u32[144,128]{1,0:T(1,128)}', space=vmem, size = 0x12000, scoped, tag = 'internal scratch']
  %s0 = inlined_call_operand.hbm [shape: f32[2,128], index: 0, kind: input, shape index: {}]
  %s1 = inlined_call_operand.hbm [shape: f32[2,8,128], index: 1, kind: input, shape index: {}]
  %s2 = inlined_call_operand.hbm [shape: bf16[128,128], index: 2, kind: input, shape index: {}]
  %s3 = inlined_call_operand.hbm [shape: bf16[128,128], index: 3, kind: input, shape index: {}]
  %s4 = inlined_call_operand.vmem [shape: f32[1,128], index: 4, kind: input, shape index: {}]
  %s5 = inlined_call_operand.hbm [shape: f32[2,128], index: 5, kind: output, shape index: {0}]
  %s6 = inlined_call_operand.hbm [shape: f32[2,8], index: 6, kind: output, shape index: {1}]
  %7 = xla_tuple %s5, %s6
  %s8 = sld [smem:[#allocation0]]
  $region54: #{tpu_custom_call.1} parent=0
    _
  %s10 = ssub.s32 1, %s8
  %s11 = scalar_select 0, %s10, %s8
  $region1: #{tpu_custom_call.1} parent=0
    #allocation2 [shape = 'u8[1024]{0}', space=vmem, size = 0x400, scoped, tag = 'input window, operand 0, single buffered']
    #allocation3 [shape = 's32[1]{0}', space=sflag, size = 0x4, scoped, tag = 'scoped memory for tpu_custom_call.1']
    #allocation4 [shape = 's32[1]{0}', space=sflag, size = 0x4, scoped, tag = 'scoped memory for tpu_custom_call.1']
    #allocation5 [shape = 'u8[8192]{0}', space=vmem, size = 0x2000, scoped, tag = 'input window, operand 1, single buffered']
    #allocation6 [shape = 's32[1]{0}', space=sflag, size = 0x4, scoped, tag = 'scoped memory for tpu_custom_call.1']
    #allocation7 [shape = 'u8[32768]{0}', space=vmem, size = 0x8000, scoped, tag = 'input window, operand 2, single buffered']
    #allocation8 [shape = 'u8[32768]{0}', space=vmem, size = 0x8000, scoped, tag = 'input window, operand 3, single buffered']
    #allocation9 [shape = 's32[1]{0}', space=sflag, size = 0x4, scoped, tag = 'scoped memory for tpu_custom_call.1']
    #allocation10 [shape = 'u8[1024]{0}', space=vmem, size = 0x400, scoped, tag = 'output window, operand 0, single buffered']
    #allocation11 [shape = 'u8[1024]{0}', space=vmem, size = 0x400, scoped, tag = 'output window, operand 1, single buffered']
    #allocation12 [shape = 's32[1]{0}', space=sflag, size = 0x4, scoped, tag = 'scoped memory for tpu_custom_call.1']
    %12 = vsyncpa [#allocation3], 0
    %13 = vsyncpa [#allocation6], 0
    %14 = vsyncpa [#allocation9], 0
    %15 = vsyncpa [#allocation4], 0
    %16 = vsyncpa [#allocation12], 0
    // Predicated region
    $region2: #{tpu_custom_call.1} parent=1 // pred_check
      _
    $region3: #{tpu_custom_call.1} parent=1 // pred_check_branch
      %18 = sbr.rel (0) target = $region5
    $region4: #{tpu_custom_call.1} parent=1 // pred_region
      %s20 = ssub.s32 32, 32
      %21 = vsyncadd [#allocation3], %s20
      %s23 = sshll.u32 [#allocation2], 4
      %s24 = int_to_ptr.vmem [resolvable:$true] %s23
      %26 = dma.hbm_to_vmem [thread:$0]  %s0, 32, %s24, [#allocation3]
    $region5: #{tpu_custom_call.1} parent=1 // pred_fallthru
      _
    // Predicated region
    $region6: #{tpu_custom_call.1} parent=1 // pred_check
      _
    $region7: #{tpu_custom_call.1} parent=1 // pred_check_branch
      %28 = sbr.rel (0) target = $region9
    $region8: #{tpu_custom_call.1} parent=1 // pred_region
      %s30 = ssub.s32 256, 256
      %31 = vsyncadd [#allocation6], %s30
      %s32 = sshll.u32 [#allocation5], 4
      %s33 = int_to_ptr.vmem [resolvable:$true] %s32
      %38 = dma.hbm_to_vmem [thread:$0]  %s1, 256, %s33, [#allocation6], 128, 128, 8
    $region9: #{tpu_custom_call.1} parent=1 // pred_fallthru
      _
    // Predicated region
    $region10: #{tpu_custom_call.1} parent=1 // pred_check
      _
    $region11: #{tpu_custom_call.1} parent=1 // pred_check_branch
      %40 = sbr.rel (0) target = $region13
    $region12: #{tpu_custom_call.1} parent=1 // pred_region
      %s42 = ssub.s32 1024, 1024
      %43 = vsyncadd [#allocation6], %s42
      %s44 = sshll.u32 [#allocation7], 4
      %s45 = int_to_ptr.vmem [resolvable:$true] %s44
      %50 = dma.hbm_to_vmem [thread:$0]  %s2, 1024, %s45, [#allocation6], 64, 64, 4
    $region13: #{tpu_custom_call.1} parent=1 // pred_fallthru
      _
    // Predicated region
    $region14: #{tpu_custom_call.1} parent=1 // pred_check
      _
    $region15: #{tpu_custom_call.1} parent=1 // pred_check_branch
      %52 = sbr.rel (0) target = $region17
    $region16: #{tpu_custom_call.1} parent=1 // pred_region
      %s54 = ssub.s32 1024, 1024
      %55 = vsyncadd [#allocation9], %s54
      %s56 = sshll.u32 [#allocation8], 4
      %s57 = int_to_ptr.vmem [resolvable:$true] %s56
      %62 = dma.hbm_to_vmem [thread:$0]  %s3, 1024, %s57, [#allocation9], 64, 64, 4
    $region17: #{tpu_custom_call.1} parent=1 // pred_fallthru
      _
    // Predicated region
    $region18: #{tpu_custom_call.1} parent=1 // pred_check
      _
    $region19: #{tpu_custom_call.1} parent=1 // pred_check_branch
      %64 = sbr.rel (0) target = $region21
    $region20: #{tpu_custom_call.1} parent=1 // pred_region
      _
    $region21: #{tpu_custom_call.1} parent=1 // pred_fallthru
      _
    // Predicated region
    $region22: #{tpu_custom_call.1} parent=1 // pred_check
      _
    $region23: #{tpu_custom_call.1} parent=1 // pred_check_branch
      %66 = sbr.rel (0) target = $region25
    $region24: #{tpu_custom_call.1} parent=1 // pred_region
      %67 = dma.done [#allocation3], 32
    $region25: #{tpu_custom_call.1} parent=1 // pred_fallthru
      _
    // Predicated region
    $region26: #{tpu_custom_call.1} parent=1 // pred_check
      _
    $region27: #{tpu_custom_call.1} parent=1 // pred_check_branch
      %69 = sbr.rel (0) target = $region29
    $region28: #{tpu_custom_call.1} parent=1 // pred_region
      %70 = dma.done [#allocation6], 256
    $region29: #{tpu_custom_call.1} parent=1 // pred_fallthru
      _
    // Predicated region
    $region30: #{tpu_custom_call.1} parent=1 // pred_check
      _
    $region31: #{tpu_custom_call.1} parent=1 // pred_check_branch
      %72 = sbr.rel (0) target = $region33
    $region32: #{tpu_custom_call.1} parent=1 // pred_region
      %73 = dma.done [#allocation6], 1024
    $region33: #{tpu_custom_call.1} parent=1 // pred_fallthru
      _
    // Predicated region
    $region34: #{tpu_custom_call.1} parent=1 // pred_check
      _
    $region35: #{tpu_custom_call.1} parent=1 // pred_check_branch
      %75 = sbr.rel (0) target = $region37
    $region36: #{tpu_custom_call.1} parent=1 // pred_region
      %76 = dma.done [#allocation9], 1024
    $region37: #{tpu_custom_call.1} parent=1 // pred_fallthru
      _
    %v78 = vld [vmem:[#allocation2] sm:$0x3]
    %v79 = vld [vmem:[#allocation5] sm:$0xff]
    %v80 = vld [vmem:[#allocation5 + $0x8] sm:$0xff]
    %v81 = vpack.c.bf16 %v78, %v78
    %v82 = vld [vmem:[#allocation7] sm:$0xf]
    %v83 = vld [vmem:[#allocation7 + $0x4] sm:$0xf]
    %v84 = vld [vmem:[#allocation7 + $0x8] sm:$0xf]
    %v85 = vld [vmem:[#allocation7 + $0xc] sm:$0xf]
    %v86 = vld [vmem:[#allocation7 + $0x10] sm:$0xf]
    %v87 = vld [vmem:[#allocation7 + $0x14] sm:$0xf]
    %v88 = vld [vmem:[#allocation7 + $0x18] sm:$0xf]
    %v89 = vld [vmem:[#allocation7 + $0x1c] sm:$0xf]
    %v90 = vld [vmem:[#allocation7 + $0x20] sm:$0xf]
    %v91 = vld [vmem:[#allocation7 + $0x24] sm:$0xf]
    %v92 = vld [vmem:[#allocation7 + $0x28] sm:$0xf]
    %v93 = vld [vmem:[#allocation7 + $0x2c] sm:$0xf]
    %v94 = vld [vmem:[#allocation7 + $0x30] sm:$0xf]
    %v95 = vld [vmem:[#allocation7 + $0x34] sm:$0xf]
    %v96 = vld [vmem:[#allocation7 + $0x38] sm:$0xf]
    %v97 = vld [vmem:[#allocation7 + $0x3c] sm:$0xf]
    %v114 = vunpack.c.l.b16 %v82
    %v115 = vunpack.c.l.b16 %v83
    %v116 = vunpack.c.l.b16 %v84
    %v117 = vunpack.c.l.b16 %v85
    %v118 = vunpack.c.l.b16 %v86
    %v119 = vunpack.c.l.b16 %v87
    %v120 = vunpack.c.l.b16 %v88
    %v121 = vunpack.c.l.b16 %v89
    %v122 = vunpack.c.l.b16 %v90
    %v123 = vunpack.c.l.b16 %v91
    %v124 = vunpack.c.l.b16 %v92
    %v125 = vunpack.c.l.b16 %v93
    %v126 = vunpack.c.l.b16 %v94
    %v127 = vunpack.c.l.b16 %v95
    %v128 = vunpack.c.l.b16 %v96
    %v129 = vunpack.c.l.b16 %v97
    %v130 = vpack.c.b16 %v115, %v114
    %v131 = vpack.c.b16 %v117, %v116
    %v132 = vpack.c.b16 %v119, %v118
    %v133 = vpack.c.b16 %v121, %v120
    %v134 = vpack.c.b16 %v123, %v122
    %v135 = vpack.c.b16 %v125, %v124
    %v136 = vpack.c.b16 %v127, %v126
    %v137 = vpack.c.b16 %v129, %v128
    %146 = vmatprep.subr.bf16.mxu0 0
    %147 = vmatpush1.bf16.msra.mxu0 %v130
    %148 = vmatprep.subr.bf16.mxu0 0
    %149 = vmatpush1.bf16.msra.mxu0 %v131
    %150 = vmatprep.subr.bf16.mxu0 0
    %151 = vmatpush1.bf16.msra.mxu0 %v132
    %152 = vmatprep.subr.bf16.mxu0 0
    %153 = vmatpush1.bf16.msra.mxu0 %v133
    %154 = vmatprep.subr.bf16.mxu0 0
    %155 = vmatpush1.bf16.msra.mxu0 %v134
    %156 = vmatprep.subr.bf16.mxu0 0
    %157 = vmatpush1.bf16.msra.mxu0 %v135
    %158 = vmatprep.subr.bf16.mxu0 0
    %159 = vmatpush1.bf16.msra.mxu0 %v136
    %160 = vmatprep.subr.bf16.mxu0 0
    %161 = vmatpush1.bf16.msra.mxu0 %v137
    %162 = vmatprep.subr.bf16.mxu0 0
    %163 = vmatpush1.bf16.msra.mxu0 0
    %164 = vmatprep.subr.bf16.mxu0 0
    %165 = vmatpush1.bf16.msra.mxu0 0
    %166 = vmatprep.subr.bf16.mxu0 0
    %167 = vmatpush1.bf16.msra.mxu0 0
    %168 = vmatprep.subr.bf16.mxu0 0
    %169 = vmatpush1.bf16.msra.mxu0 0
    %170 = vmatprep.subr.bf16.mxu0 0
    %171 = vmatpush1.bf16.msra.mxu0 0
    %172 = vmatprep.subr.bf16.mxu0 0
    %173 = vmatpush1.bf16.msra.mxu0 0
    %174 = vmatprep.subr.bf16.mxu0 0
    %175 = vmatpush1.bf16.msra.mxu0 0
    %176 = vmatprep.subr.bf16.mxu0 0
    %177 = vmatpush1.bf16.msra.mxu0 0
    %178 = vmatprep.mubr.bf16.mxu0 0
    %179 = vmatmul.mubr.bf16.gmra.mrb[0].mxu0 %v81
    %v180 = vpop.f32.mrb[0].mxu0
    %v181 = vadd.f32 0.0, %v180
    %v182 = vpop.f32.mrb[0].mxu0
    %v183 = vpop.f32.mrb[0].mxu0
    %v184 = vpop.f32.mrb[0].mxu0
    %185 = vdwg.mxu0
    %v186 = vpack.c.bf16 %v80, %v79
    %v187 = vld [vmem:[#allocation8] sm:$0xf]
    %v188 = vld [vmem:[#allocation8 + $0x4] sm:$0xf]
    %v189 = vld [vmem:[#allocation8 + $0x8] sm:$0xf]
    %v190 = vld [vmem:[#allocation8 + $0xc] sm:$0xf]
    %v191 = vld [vmem:[#allocation8 + $0x10] sm:$0xf]
    %v192 = vld [vmem:[#allocation8 + $0x14] sm:$0xf]
    %v193 = vld [vmem:[#allocation8 + $0x18] sm:$0xf]
    %v194 = vld [vmem:[#allocation8 + $0x1c] sm:$0xf]
    %v195 = vld [vmem:[#allocation8 + $0x20] sm:$0xf]
    %v196 = vld [vmem:[#allocation8 + $0x24] sm:$0xf]
    %v197 = vld [vmem:[#allocation8 + $0x28] sm:$0xf]
    %v198 = vld [vmem:[#allocation8 + $0x2c] sm:$0xf]
    %v199 = vld [vmem:[#allocation8 + $0x30] sm:$0xf]
    %v200 = vld [vmem:[#allocation8 + $0x34] sm:$0xf]
    %v201 = vld [vmem:[#allocation8 + $0x38] sm:$0xf]
    %v202 = vld [vmem:[#allocation8 + $0x3c] sm:$0xf]
    %v219 = vunpack.c.l.b16 %v187
    %v220 = vunpack.c.l.b16 %v188
    %v221 = vunpack.c.l.b16 %v189
    %v222 = vunpack.c.l.b16 %v190
    %v223 = vunpack.c.l.b16 %v191
    %v224 = vunpack.c.l.b16 %v192
    %v225 = vunpack.c.l.b16 %v193
    %v226 = vunpack.c.l.b16 %v194
    %v227 = vunpack.c.l.b16 %v195
    %v228 = vunpack.c.l.b16 %v196
    %v229 = vunpack.c.l.b16 %v197
    %v230 = vunpack.c.l.b16 %v198
    %v231 = vunpack.c.l.b16 %v199
    %v232 = vunpack.c.l.b16 %v200
    %v233 = vunpack.c.l.b16 %v201
    %v234 = vunpack.c.l.b16 %v202
    %v235 = vpack.c.b16 %v220, %v219
    %v236 = vpack.c.b16 %v222, %v221
    %v237 = vpack.c.b16 %v224, %v223
    %v238 = vpack.c.b16 %v226, %v225
    %v239 = vpack.c.b16 %v228, %v227
    %v240 = vpack.c.b16 %v230, %v229
    %v241 = vpack.c.b16 %v232, %v231
    %v242 = vpack.c.b16 %v234, %v233
    %251 = vmatprep.subr.bf16.mxu0 0
    %252 = vmatpush1.bf16.msra.mxu0 %v235
    %253 = vmatprep.subr.bf16.mxu0 0
    %254 = vmatpush1.bf16.msra.mxu0 %v236
    %255 = vmatprep.subr.bf16.mxu0 0
    %256 = vmatpush1.bf16.msra.mxu0 %v237
    %257 = vmatprep.subr.bf16.mxu0 0
    %258 = vmatpush1.bf16.msra.mxu0 %v238
    %259 = vmatprep.subr.bf16.mxu0 0
    %260 = vmatpush1.bf16.msra.mxu0 %v239
    %261 = vmatprep.subr.bf16.mxu0 0
    %262 = vmatpush1.bf16.msra.mxu0 %v240
    %263 = vmatprep.subr.bf16.mxu0 0
    %264 = vmatpush1.bf16.msra.mxu0 %v241
    %265 = vmatprep.subr.bf16.mxu0 0
    %266 = vmatpush1.bf16.msra.mxu0 %v242
    %267 = vmatprep.subr.bf16.mxu0 0
    %268 = vmatpush1.bf16.msra.mxu0 0
    %269 = vmatprep.subr.bf16.mxu0 0
    %270 = vmatpush1.bf16.msra.mxu0 0
    %271 = vmatprep.subr.bf16.mxu0 0
    %272 = vmatpush1.bf16.msra.mxu0 0
    %273 = vmatprep.subr.bf16.mxu0 0
    %274 = vmatpush1.bf16.msra.mxu0 0
    %275 = vmatprep.subr.bf16.mxu0 0
    %276 = vmatpush1.bf16.msra.mxu0 0
    %277 = vmatprep.subr.bf16.mxu0 0
    %278 = vmatpush1.bf16.msra.mxu0 0
    %279 = vmatprep.subr.bf16.mxu0 0
    %280 = vmatpush1.bf16.msra.mxu0 0
    %281 = vmatprep.subr.bf16.mxu0 0
    %282 = vmatpush1.bf16.msra.mxu0 0
    %283 = vmatprep.mubr.bf16.mxu0 0
    %284 = vmatmul.mubr.bf16.gmra.mrb[0].mxu0 %v186
    %v285 = vpop.f32.mrb[0].mxu0
    %v286 = vadd.f32 0.0, %v285
    %v287 = vpop.f32.mrb[0].mxu0
    %v288 = vpop.f32.mrb[0].mxu0
    %v289 = vadd.f32 0.0, %v288
    %v290 = vpop.f32.mrb[0].mxu0
    %291 = vdwg.mxu0
    %v294 = vunpack.c.l.s4 1966171168
    %v295 = vunpack.c.0.s8 %v294
    %v296 = vlaneseq
    %v297 = vshrl.u32 %v296, 7
    %v298 = vsub.s32 %v295, %v297
    %v299 = vrot.slane %v181, %v298
    %v300 = vcombine.high %v299, %v299
    %v302 = vunpack.c.l.s4 1966171168
    %v303 = vunpack.c.0.s8 %v302
    %v304 = vlaneseq
    %v305 = vshrl.u32 %v304, 7
    %v306 = vsub.s32 %v303, %v305
    %v307 = vrot.slane %v299, %v306
    %v309 = vunpack.c.l.s4 1966171168
    %v310 = vunpack.c.0.s8 %v309
    %v311 = vlaneseq
    %v312 = vshrl.u32 %v311, 7
    %v313 = vsub.s32 %v310, %v312
    %v314 = vrot.slane %v300, %v313
    %v315 = vlaneseq
    %v316 = vshrl.u32 %v315, 7
    %v317 = vsub.s32 0, %v316
    %v318 = vrot.slane %v307, %v317
    %v319 = vlaneseq
    %v320 = vshrl.u32 %v319, 7
    %v321 = vsub.s32 0, %v320
    %v322 = vrot.slane %v314, %v321
    %v325 = vadd.f32 %v318, %v286
    %v326 = vadd.f32 %v322, %v289
    %v327 = vtanh.pop %v325
    %v328 = vtanh.pop %v326
    %v329 = vld [vmem:[%s4] sm:$0x1]
    %v331 = vlaneseq
    %v332 = vshrl.u32 %v331, 7
    %v333 = vsub.s32 0, %v332
    %v334 = vrot.slane %v329, %v333
    %v336 = vmul.f32 %v327, %v334
    %v337 = vmul.f32 %v328, %v334
    %338 = vadd.xlane.f32.xlu0 %v336
    %v339 = vpop.xlane.xlu0 %338
    %340 = vadd.xlane.f32.xlu0 %v337
    %v341 = vpop.xlane.xlu0 %340
    %v344 = vlaneseq
    %v345 = vand.u32 %v344, 127
    %v346 = vlaneseq
    %v347 = vshrl.u32 %v346, 7
    %v348 = vsub.s32 %v345, %v347
    %v349 = vrot.slane %v339, %v348
    %v350 = vlaneseq
    %v351 = vshrl.u32 %v350, 7
    %v352 = vsub.s32 %v345, %v351
    %v353 = vrot.slane %v341, %v352
    %vm354 = vcmask 1041409
    %v355 = vsel %vm354, %v353, %v349
    %vm357 = vcmask 58368
    %v358 = vsel %vm357, %v355, -inf
    %359 = vmax.xlane.f32.xlu0 %v358
    %v360 = vpop.xlane.xlu0 %359
    %v362 = vlaneseq
    %v363 = vshrl.u32 %v362, 7
    %v364 = vsub.s32 0, %v363
    %v365 = vrot.slane %v360, %v364
    %v366 = vlaneseq
    %v367 = vshrl.u32 %v366, 7
    %v368 = vsub.s32 1, %v367
    %v369 = vrot.slane %v360, %v368
    %v372 = vsub.f32 %v339, %v365
    %v373 = vsub.f32 %v341, %v369
    %v374 = vmul.f32 %v372, 1.442695
    %v375 = vpow.pop %v374
    %v376 = vmul.f32 %v373, 1.442695
    %v377 = vpow.pop %v376
    %380 = vset.pattern.permute.xlu0 0
    %381 = vperm.xlu0 %380, %v375
    %v382 = vpop.permute.xlu0 %381
    %383 = vset.pattern.permute.xlu0 0
    %384 = vperm.xlu0 %383, %v377
    %v385 = vpop.permute.xlu0 %384
    %v386 = vlaneseq
    %v387 = vshrl.u32 %v386, 7
    %v388 = vsub.s32 %v345, %v387
    %v389 = vrot.slane %v382, %v388
    %v390 = vlaneseq
    %v391 = vshrl.u32 %v390, 7
    %v392 = vsub.s32 %v345, %v391
    %v393 = vrot.slane %v385, %v392
    %v394 = vsel %vm354, %v393, %v389
    %v396 = vsel %vm357, %v394, 0.0
    %397 = vadd.xlane.f32.xlu0 %v396
    %v398 = vpop.xlane.xlu0 %397
    %v400 = vlaneseq
    %v401 = vshrl.u32 %v400, 7
    %v402 = vsub.s32 0, %v401
    %v403 = vrot.slane %v398, %v402
    %v404 = vlaneseq
    %v405 = vshrl.u32 %v404, 7
    %v406 = vsub.s32 1, %v405
    %v407 = vrot.slane %v398, %v406
    %v410 = vrcp.pop %v403
    %v411 = vmul.f32 %v375, %v410
    %v412 = vrcp.pop %v407
    %v413 = vmul.f32 %v377, %v412
    %415 = vset.pattern.permute.xlu0 0
    %416 = vperm.xlu0 %415, %v411
    %v417 = vpop.permute.xlu0 %416
    %420 = vset.pattern.permute.xlu0 0
    %421 = vperm.xlu0 %420, %v413
    %v422 = vpop.permute.xlu0 %421
    %v424 = vmul.f32 %v417, %v79
    %v425 = vmul.f32 %v422, %v80
    %v426 = vrot.slane %v424, 4
    %v427 = vadd.f32 %v424, %v426
    %v428 = vrot.slane %v427, 2
    %v429 = vadd.f32 %v427, %v428
    %v430 = vrot.slane %v429, 1
    %v431 = vadd.f32 %v429, %v430
    %v432 = vrot.slane %v425, 4
    %v433 = vadd.f32 %v425, %v432
    %v434 = vrot.slane %v433, 2
    %v435 = vadd.f32 %v433, %v434
    %v436 = vrot.slane %v435, 1
    %v437 = vadd.f32 %v435, %v436
    %v440 = vsel %vm354, %v437, %v431
    %442 = vst [vmem:[#allocation10] sm:$0x3] %v440
    %v443 = vlaneseq
    %v444 = vshrl.u32 %v443, 7
    %v445 = vsub.s32 %v345, %v444
    %v446 = vrot.slane %v417, %v445
    %v447 = vlaneseq
    %v448 = vshrl.u32 %v447, 7
    %v449 = vsub.s32 %v345, %v448
    %v450 = vrot.slane %v422, %v449
    %v451 = vsel %vm354, %v450, %v446
    %453 = vst.msk [vmem:[#allocation11] sm:$0x3] %vm357, %v451
    // Predicated region
    $region38: #{tpu_custom_call.1} parent=1 // pred_check
      _
    $region39: #{tpu_custom_call.1} parent=1 // pred_check_branch
      %455 = sbr.rel (0) target = $region41
    $region40: #{tpu_custom_call.1} parent=1 // pred_region
      %s457 = ssub.s32 32, 32
      %458 = vsyncadd [#allocation4], %s457
      %s460 = sshll.u32 [#allocation10], 4
      %s461 = int_to_ptr.vmem [resolvable:$true] %s460
      %463 = dma.vmem_to_hbm [thread:$0]  %s461, 32, %s5, [#allocation4]
    $region41: #{tpu_custom_call.1} parent=1 // pred_fallthru
      _
    // Predicated region
    $region42: #{tpu_custom_call.1} parent=1 // pred_check
      _
    $region43: #{tpu_custom_call.1} parent=1 // pred_check_branch
      %465 = sbr.rel (0) target = $region45
    $region44: #{tpu_custom_call.1} parent=1 // pred_region
      %s467 = ssub.s32 32, 32
      %468 = vsyncadd [#allocation12], %s467
      %s470 = sshll.u32 [#allocation11], 4
      %s471 = int_to_ptr.vmem [resolvable:$true] %s470
      %473 = dma.vmem_to_hbm [thread:$0]  %s471, 32, %s6, [#allocation12]
    $region45: #{tpu_custom_call.1} parent=1 // pred_fallthru
      _
    // Predicated region
    $region46: #{tpu_custom_call.1} parent=1 // pred_check
      _
    $region47: #{tpu_custom_call.1} parent=1 // pred_check_branch
      %475 = sbr.rel (0) target = $region49
    $region48: #{tpu_custom_call.1} parent=1 // pred_region
      %476 = dma.done [#allocation4], 32
    $region49: #{tpu_custom_call.1} parent=1 // pred_fallthru
      _
    // Predicated region
    $region50: #{tpu_custom_call.1} parent=1 // pred_check
      _
    $region51: #{tpu_custom_call.1} parent=1 // pred_check_branch
      %478 = sbr.rel (0) target = $region53
    $region52: #{tpu_custom_call.1} parent=1 // pred_region
      %479 = dma.done [#allocation12], 32
    $region53: #{tpu_custom_call.1} parent=1 // pred_fallthru
      _
    %480 = vsyncpa [#allocation3], 1
    %481 = vsyncpa [#allocation6], 1
    %482 = vsyncpa [#allocation9], 1
    %483 = vsyncpa [#allocation4], 1
    %484 = vsyncpa [#allocation12], 1

</llo_original>
